<compile_context>
chip_gen: v7x
topology: tpu7x:2x2x1
jax: 0.10.0
libtpu: 0.0.40
codegen_flags: <defaults>
</compile_context>

<pallas_src>
import functools

import jax
import jax.numpy as jnp
import numpy as np
from jax.experimental import pallas as pl
from jax.experimental.pallas import tpu as pltpu

DEFAULT_DT = 0.01
DEFAULT_GAMMA = 0.9
DEFAULT_RF_ADAPTIVE_B_offset_a = 0.0
DEFAULT_RF_ADAPTIVE_B_offset_b = 3.0
DEFAULT_RF_B_offset = 1.0
DEFAULT_RF_THETA = 0.1

# Row layout of the packed per-neuron parameter slab (padded to 8 sublanes).
_ROW_BOFF, _ROW_COS, _ROW_SIN, _ROW_GAMMA, _ROW_DT = 0, 1, 2, 3, 4
_PARAM_ROWS = 8


def _adbrf_ii_kernel(x_ref, w_ref,
                     z_ref, u_ref, v_ref, q_ref,
                     params_ref,
                     z_out_ref, u_out_ref, v_out_ref, q_out_ref):
    # in_sum = Linear(x) = x @ W^T  (bias=False)  -- single MXU call per tile.
    in_sum = jnp.dot(x_ref[...], w_ref[...], preferred_element_type=jnp.float32)

    z_old = z_ref[...]
    u_old = u_ref[...]
    v_old = v_ref[...]
    q_old = q_ref[...]

    # Packed per-neuron parameters: one (8, TILE_L) load, static row slices
    # ([1, TILE_L]) broadcast over the batch tile below.
    p = params_ref[...]
    b0 = -jnp.abs(p[_ROW_BOFF:_ROW_BOFF + 1, :])   # b = -|b_offset|
    cos_wdt = p[_ROW_COS:_ROW_COS + 1, :]
    sin_wdt = p[_ROW_SIN:_ROW_SIN + 1, :]
    gamma = p[_ROW_GAMMA:_ROW_GAMMA + 1, :]
    dt = p[_ROW_DT:_ROW_DT + 1, :]

    # adbrf_II_update (elementwise; VPU + EUP for exp)
    b = b0 - q_old
    exp_bdt = jnp.exp(b * dt)
    u_cos_sin = u_old * cos_wdt - v_old * sin_wdt
    v_cos_sin = u_old * sin_wdt + v_old * cos_wdt
    u_new = exp_bdt * u_cos_sin + in_sum * dt
    v_new = exp_bdt * v_cos_sin
    q_new = gamma * q_old + z_old
    # FGI_DGaussian forward == Heaviside spike on (u_ - theta - q_new).
    # TODO(synk): DGaussian surrogate only affects the backward pass; forward is a step.
    z_new = (u_old - DEFAULT_RF_THETA - q_new > 0.0).astype(jnp.float32)

    z_out_ref[...] = z_new
    u_out_ref[...] = u_new
    v_out_ref[...] = v_new
    q_out_ref[...] = q_new


def _round_up(a, m):
    return (a + m - 1) // m * m


def _pick_tile(dim, align, max_tile):
    """Pick a tile that is a multiple of `align`, <= max_tile, and divides the
    padded extent (minimizing over-padding)."""
    padded = _round_up(dim, align)
    tile = min(max_tile, padded)
    while padded % tile != 0:
        tile -= align
    return tile, padded


@functools.partial(jax.jit, static_argnames=("tile_b_max", "tile_l_max"))
def adbrf_ii_cell_forward(x, w_t, z, u, v, q,
                          b_offset, cos_omega_dt, sin_omega_dt, gamma, dt,
                          tile_b_max=256, tile_l_max=512):
    """Fused AdBRFIICell forward.

    x:            [B, input_size]   float32
    w_t:          [input_size, L]   float32 (Linear weight, transposed)
    z, u, v, q:   [B, L]            float32 (previous state)
    b_offset, cos_omega_dt, sin_omega_dt, gamma, dt: [L] float32
    returns (z, u, v, q) each [B, L] float32
    """
    B, In = x.shape
    L = w_t.shape[1]
    f32 = jnp.float32

    # Lane-dense, (8,128)-aligned tiling.
    tile_b, Bp = _pick_tile(B, 8, tile_b_max)
    tile_l, Lp = _pick_tile(L, 128, tile_l_max)

    def pad2(a, rows, cols):
        a = a.astype(f32)
        return jnp.pad(a, ((0, rows - a.shape[0]), (0, cols - a.shape[1])))

    xp = pad2(x, Bp, In)
    wp = pad2(w_t, In, Lp)
    zp = pad2(z, Bp, Lp)
    up = pad2(u, Bp, Lp)
    vp = pad2(v, Bp, Lp)
    qp = pad2(q, Bp, Lp)

    # Pack the five per-neuron parameter rows into one (8, Lp) slab.
    params = jnp.zeros((_PARAM_ROWS, Lp), dtype=f32)
    for row, vec in ((_ROW_BOFF, b_offset), (_ROW_COS, cos_omega_dt),
                     (_ROW_SIN, sin_omega_dt), (_ROW_GAMMA, gamma),
                     (_ROW_DT, dt)):
        params = params.at[row, :L].set(vec.astype(f32))

    grid = (Bp // tile_b, Lp // tile_l)

    state_spec = pl.BlockSpec((tile_b, tile_l), lambda i, j: (i, j))
    param_spec = pl.BlockSpec((_PARAM_ROWS, tile_l), lambda i, j: (0, j))
    x_spec = pl.BlockSpec((tile_b, In), lambda i, j: (i, 0))   # K kept whole
    w_spec = pl.BlockSpec((In, tile_l), lambda i, j: (0, j))   # K kept whole

    out_shape = tuple(jax.ShapeDtypeStruct((Bp, Lp), f32) for _ in range(4))

    # VMEM budget: every tiled stream double-buffered, + headroom; explicit so
    # the default scoped limit (16/32 MiB) never silently caps the block size
    # and we stay inside v7x's 64 MiB physical VMEM.
    vmem_bytes = 2 * 4 * (tile_b * In + In * tile_l
                          + 8 * tile_b * tile_l
                          + _PARAM_ROWS * tile_l) + (2 << 20)
    vmem_limit = int(min(64 * 1024 * 1024, max(vmem_bytes, 16 * 1024 * 1024)))

    z_n, u_n, v_n, q_n = pl.pallas_call(
        _adbrf_ii_kernel,
        out_shape=out_shape,
        grid=grid,
        in_specs=[
            x_spec,                     # x
            w_spec,                     # W^T
            state_spec,                 # z_
            state_spec,                 # u_
            state_spec,                 # v_
            state_spec,                 # q_
            param_spec,                 # packed (b_offset, cos, sin, gamma, dt)
        ],
        out_specs=tuple(state_spec for _ in range(4)),
        # In-place state update (z,u,v,q inputs -> outputs).
        input_output_aliases={2: 0, 3: 1, 4: 2, 5: 3},
        compiler_params=pltpu.CompilerParams(
            dimension_semantics=("parallel", "parallel"),
            vmem_limit_bytes=vmem_limit),
    )(xp, wp, zp, up, vp, qp, params)

    if Bp != B or Lp != L:
        z_n = z_n[:B, :L]
        u_n = u_n[:B, :L]
        v_n = v_n[:B, :L]
        q_n = q_n[:B, :L]
    return z_n, u_n, v_n, q_n


def _reference(x, w_t, z, u, v, q, b_offset, cos_wdt, sin_wdt, gamma, dt,
               theta=DEFAULT_RF_THETA):
    in_sum = x @ w_t
    b0 = -jnp.abs(b_offset)
    b = b0 - q
    exp_bdt = jnp.exp(b * dt)
    u_cs = u * cos_wdt - v * sin_wdt
    v_cs = u * sin_wdt + v * cos_wdt
    u_new = exp_bdt * u_cs + in_sum * dt
    v_new = exp_bdt * v_cs
    q_new = gamma * q + z
    z_new = (u - theta - q_new > 0.0).astype(jnp.float32)
    return z_new, u_new, v_new, q_new


if __name__ == "__main__":
    key = jax.random.PRNGKey(0)
    B, input_size, layer_size = 4, 16, 32
    dt_scalar = DEFAULT_DT

    k = iter(jax.random.split(key, 12))

    # Deterministic parameter init (mirrors AdBRFIICell.__init__ shapes).
    # Linear weight [layer_size, input_size], xavier_uniform; stored transposed.
    limit = np.sqrt(6.0 / (input_size + layer_size))
    w = jax.random.uniform(next(k), (layer_size, input_size),
                           minval=-limit, maxval=limit, dtype=jnp.float32)
    w_t = w.T

    # omega = fftfreq(2L, d=dt)[:L] = arange(L) / (2*L*dt)
    omega = jnp.arange(layer_size, dtype=jnp.float32) / (2 * layer_size * dt_scalar)
    # adaptive b_offset ~ U(0, 3)
    b_offset = jax.random.uniform(next(k), (layer_size,),
                                  minval=DEFAULT_RF_ADAPTIVE_B_offset_a,
                                  maxval=DEFAULT_RF_ADAPTIVE_B_offset_b,
                                  dtype=jnp.float32)
    dt = jnp.full((layer_size,), dt_scalar, dtype=jnp.float32)
    # adaptive gamma ~ N(0.9, 0.001)
    gamma = DEFAULT_GAMMA + 0.001 * jax.random.normal(next(k), (layer_size,),
                                                      dtype=jnp.float32)
    cos_omega_dt = jnp.cos(omega * dt)
    sin_omega_dt = jnp.sin(omega * dt)

    # Inputs / state.
    x = jax.random.normal(next(k), (B, input_size), dtype=jnp.float32)
    z0 = (jax.random.uniform(next(k), (B, layer_size)) > 0.5).astype(jnp.float32)
    u0 = jax.random.normal(next(k), (B, layer_size), dtype=jnp.float32)
    v0 = jax.random.normal(next(k), (B, layer_size), dtype=jnp.float32)
    q0 = jax.random.normal(next(k), (B, layer_size), dtype=jnp.float32)

    out = adbrf_ii_cell_forward(x, w_t, z0, u0, v0, q0,
                                b_offset, cos_omega_dt, sin_omega_dt, gamma, dt)
    out = jax.block_until_ready(out)

    ref = _reference(x, w_t, z0, u0, v0, q0,
                     b_offset, cos_omega_dt, sin_omega_dt, gamma, dt)
    for o, r in zip(out, ref):
        np.testing.assert_allclose(np.asarray(o), np.asarray(r),
                                   rtol=1e-5, atol=1e-5)

    print("KERNEL_OK")
</pallas_src>

<mosaic_0001>
module attributes {stable_mosaic.version = 11 : i64} {
  func.func @_adbrf_ii_kernel(%arg0: i32, %arg1: i32, %arg2: memref<8x16xf32, #tpu.memory_space<vmem>>, %arg3: memref<16x128xf32, #tpu.memory_space<vmem>>, %arg4: memref<8x128xf32, #tpu.memory_space<vmem>>, %arg5: memref<8x128xf32, #tpu.memory_space<vmem>>, %arg6: memref<8x128xf32, #tpu.memory_space<vmem>>, %arg7: memref<8x128xf32, #tpu.memory_space<vmem>>, %arg8: memref<8x128xf32, #tpu.memory_space<vmem>>, %arg9: memref<8x128xf32, #tpu.memory_space<vmem>>, %arg10: memref<8x128xf32, #tpu.memory_space<vmem>>, %arg11: memref<8x128xf32, #tpu.memory_space<vmem>>, %arg12: memref<8x128xf32, #tpu.memory_space<vmem>>) attributes {dimension_semantics = [#tpu.dimension_semantics<parallel>, #tpu.dimension_semantics<parallel>], iteration_bounds = array<i64: 1, 1>, scalar_prefetch = 0 : i64, scratch_operands = 0 : i64, tpu.core_type = #tpu.core_type<tc>, window_params = [{transform_indices = @transform_0, window_bounds = array<i64: 8, 16>}, {transform_indices = @transform_1, window_bounds = array<i64: 16, 128>}, {transform_indices = @transform_2, window_bounds = array<i64: 8, 128>}, {transform_indices = @transform_3, window_bounds = array<i64: 8, 128>}, {transform_indices = @transform_4, window_bounds = array<i64: 8, 128>}, {transform_indices = @transform_5, window_bounds = array<i64: 8, 128>}, {transform_indices = @transform_6, window_bounds = array<i64: 8, 128>}, {transform_indices = @transform_7, window_bounds = array<i64: 8, 128>}, {transform_indices = @transform_8, window_bounds = array<i64: 8, 128>}, {transform_indices = @transform_9, window_bounds = array<i64: 8, 128>}, {transform_indices = @transform_10, window_bounds = array<i64: 8, 128>}]} {
    %c0 = arith.constant 0 : index
    %c0_0 = arith.constant 0 : index
    %0 = vector.load %arg2[%c0, %c0_0] : memref<8x16xf32, #tpu.memory_space<vmem>>, vector<8x16xf32>
    %c0_1 = arith.constant 0 : index
    %c0_2 = arith.constant 0 : index
    %1 = vector.load %arg3[%c0_1, %c0_2] : memref<16x128xf32, #tpu.memory_space<vmem>>, vector<16x128xf32>
    %cst = arith.constant dense<0.000000e+00> : vector<8x128xf32>
    %2 = tpu.matmul %0, %1, %cst {dimension_numbers = #tpu.dot_dimension_numbers<[1], [0], [0], [1], [0, 0, 1, 1], [], []>} : vector<8x16xf32>, vector<16x128xf32>, vector<8x128xf32> -> vector<8x128xf32>
    %c0_3 = arith.constant 0 : index
    %c0_4 = arith.constant 0 : index
    %3 = vector.load %arg4[%c0_3, %c0_4] : memref<8x128xf32, #tpu.memory_space<vmem>>, vector<8x128xf32>
    %c0_5 = arith.constant 0 : index
    %c0_6 = arith.constant 0 : index
    %4 = vector.load %arg5[%c0_5, %c0_6] : memref<8x128xf32, #tpu.memory_space<vmem>>, vector<8x128xf32>
    %c0_7 = arith.constant 0 : index
    %c0_8 = arith.constant 0 : index
    %5 = vector.load %arg6[%c0_7, %c0_8] : memref<8x128xf32, #tpu.memory_space<vmem>>, vector<8x128xf32>
    %c0_9 = arith.constant 0 : index
    %c0_10 = arith.constant 0 : index
    %6 = vector.load %arg7[%c0_9, %c0_10] : memref<8x128xf32, #tpu.memory_space<vmem>>, vector<8x128xf32>
    %c0_11 = arith.constant 0 : index
    %c0_12 = arith.constant 0 : index
    %7 = vector.load %arg8[%c0_11, %c0_12] : memref<8x128xf32, #tpu.memory_space<vmem>>, vector<8x128xf32>
    %8 = vector.extract_strided_slice %7 {offsets = [0, 0], sizes = [1, 128], strides = [1, 1]} : vector<8x128xf32> to vector<1x128xf32>
    %9 = math.absf %8 : vector<1x128xf32>
    %cst_13 = arith.constant 0.000000e+00 : f32
    %10 = vector.broadcast %cst_13 : f32 to vector<1x128xf32>
    %11 = arith.subf %10, %9 : vector<1x128xf32>
    %12 = vector.extract_strided_slice %7 {offsets = [1, 0], sizes = [1, 128], strides = [1, 1]} : vector<8x128xf32> to vector<1x128xf32>
    %13 = vector.extract_strided_slice %7 {offsets = [2, 0], sizes = [1, 128], strides = [1, 1]} : vector<8x128xf32> to vector<1x128xf32>
    %14 = vector.extract_strided_slice %7 {offsets = [3, 0], sizes = [1, 128], strides = [1, 1]} : vector<8x128xf32> to vector<1x128xf32>
    %15 = vector.extract_strided_slice %7 {offsets = [4, 0], sizes = [1, 128], strides = [1, 1]} : vector<8x128xf32> to vector<1x128xf32>
    %16 = vector.broadcast %11 : vector<1x128xf32> to vector<8x128xf32>
    %17 = arith.subf %16, %6 : vector<8x128xf32>
    %18 = vector.broadcast %15 : vector<1x128xf32> to vector<8x128xf32>
    %19 = arith.mulf %17, %18 : vector<8x128xf32>
    %20 = math.exp %19 : vector<8x128xf32>
    %21 = vector.broadcast %12 : vector<1x128xf32> to vector<8x128xf32>
    %22 = arith.mulf %4, %21 : vector<8x128xf32>
    %23 = vector.broadcast %13 : vector<1x128xf32> to vector<8x128xf32>
    %24 = arith.mulf %5, %23 : vector<8x128xf32>
    %25 = arith.subf %22, %24 : vector<8x128xf32>
    %26 = vector.broadcast %13 : vector<1x128xf32> to vector<8x128xf32>
    %27 = arith.mulf %4, %26 : vector<8x128xf32>
    %28 = vector.broadcast %12 : vector<1x128xf32> to vector<8x128xf32>
    %29 = arith.mulf %5, %28 : vector<8x128xf32>
    %30 = arith.addf %27, %29 : vector<8x128xf32>
    %31 = arith.mulf %20, %25 : vector<8x128xf32>
    %32 = vector.broadcast %15 : vector<1x128xf32> to vector<8x128xf32>
    %33 = arith.mulf %2, %32 : vector<8x128xf32>
    %34 = arith.addf %31, %33 : vector<8x128xf32>
    %35 = arith.mulf %20, %30 : vector<8x128xf32>
    %36 = vector.broadcast %14 : vector<1x128xf32> to vector<8x128xf32>
    %37 = arith.mulf %36, %6 : vector<8x128xf32>
    %38 = arith.addf %37, %3 : vector<8x128xf32>
    %cst_14 = arith.constant 1.000000e-01 : f32
    %39 = vector.broadcast %cst_14 : f32 to vector<8x128xf32>
    %40 = arith.subf %4, %39 : vector<8x128xf32>
    %41 = arith.subf %40, %38 : vector<8x128xf32>
    %cst_15 = arith.constant 0.000000e+00 : f32
    %42 = vector.broadcast %cst_15 : f32 to vector<8x128xf32>
    %43 = arith.cmpf ogt, %41, %42 : vector<8x128xf32>
    %44 = arith.extui %43 : vector<8x128xi1> to vector<8x128xi32>
    %45 = arith.sitofp %44 : vector<8x128xi32> to vector<8x128xf32>
    %c0_16 = arith.constant 0 : index
    %c0_17 = arith.constant 0 : index
    %46 = vector.load %arg9[%c0_16, %c0_17] : memref<8x128xf32, #tpu.memory_space<vmem>>, vector<8x128xf32>
    tpu.vector_store %arg9[%c0_16, %c0_17], %45 {strides = array<i32>} : memref<8x128xf32, #tpu.memory_space<vmem>>, vector<8x128xf32>,
    %c0_18 = arith.constant 0 : index
    %c0_19 = arith.constant 0 : index
    %47 = vector.load %arg10[%c0_18, %c0_19] : memref<8x128xf32, #tpu.memory_space<vmem>>, vector<8x128xf32>
    tpu.vector_store %arg10[%c0_18, %c0_19], %34 {strides = array<i32>} : memref<8x128xf32, #tpu.memory_space<vmem>>, vector<8x128xf32>,
    %c0_20 = arith.constant 0 : index
    %c0_21 = arith.constant 0 : index
    %48 = vector.load %arg11[%c0_20, %c0_21] : memref<8x128xf32, #tpu.memory_space<vmem>>, vector<8x128xf32>
    tpu.vector_store %arg11[%c0_20, %c0_21], %35 {strides = array<i32>} : memref<8x128xf32, #tpu.memory_space<vmem>>, vector<8x128xf32>,
    %c0_22 = arith.constant 0 : index
    %c0_23 = arith.constant 0 : index
    %49 = vector.load %arg12[%c0_22, %c0_23] : memref<8x128xf32, #tpu.memory_space<vmem>>, vector<8x128xf32>
    tpu.vector_store %arg12[%c0_22, %c0_23], %38 {strides = array<i32>} : memref<8x128xf32, #tpu.memory_space<vmem>>, vector<8x128xf32>,
    return
  }
  func.func @transform_0(%arg0: i32, %arg1: i32) -> (i32, i32) {
    %c0_i32 = arith.constant 0 : i32
    %c0_i32_0 = arith.constant 0 : i32
    return %arg0, %c0_i32 : i32, i32
  }
  func.func @transform_1(%arg0: i32, %arg1: i32) -> (i32, i32) {
    %c0_i32 = arith.constant 0 : i32
    %c0_i32_0 = arith.constant 0 : i32
    return %c0_i32, %arg1 : i32, i32
  }
  func.func @transform_2(%arg0: i32, %arg1: i32) -> (i32, i32) {
    %c0_i32 = arith.constant 0 : i32
    return %arg0, %arg1 : i32, i32
  }
  func.func @transform_3(%arg0: i32, %arg1: i32) -> (i32, i32) {
    %c0_i32 = arith.constant 0 : i32
    return %arg0, %arg1 : i32, i32
  }
  func.func @transform_4(%arg0: i32, %arg1: i32) -> (i32, i32) {
    %c0_i32 = arith.constant 0 : i32
    return %arg0, %arg1 : i32, i32
  }
  func.func @transform_5(%arg0: i32, %arg1: i32) -> (i32, i32) {
    %c0_i32 = arith.constant 0 : i32
    return %arg0, %arg1 : i32, i32
  }
  func.func @transform_6(%arg0: i32, %arg1: i32) -> (i32, i32) {
    %c0_i32 = arith.constant 0 : i32
    %c0_i32_0 = arith.constant 0 : i32
    return %c0_i32, %arg1 : i32, i32
  }
  func.func @transform_7(%arg0: i32, %arg1: i32) -> (i32, i32) {
    %c0_i32 = arith.constant 0 : i32
    return %arg0, %arg1 : i32, i32
  }
  func.func @transform_8(%arg0: i32, %arg1: i32) -> (i32, i32) {
    %c0_i32 = arith.constant 0 : i32
    return %arg0, %arg1 : i32, i32
  }
  func.func @transform_9(%arg0: i32, %arg1: i32) -> (i32, i32) {
    %c0_i32 = arith.constant 0 : i32
    return %arg0, %arg1 : i32, i32
  }
  func.func @transform_10(%arg0: i32, %arg1: i32) -> (i32, i32) {
    %c0_i32 = arith.constant 0 : i32
    return %arg0, %arg1 : i32, i32
  }
}

</mosaic_0001>

<llo_original>
// kernel: adbrf_ii_cell_forward.1
$region0: #{adbrf_ii_cell_forward.1}
  #allocation0 [shape = 'u32[]', space=smem, size = 0x4, offset = 0x4, fixed_abs, tag = 'smem constant byte address 0x4 - core index']
  #allocation1 [shape = 'u32[144,128]{1,0:T(1,128)}', space=vmem, size = 0x12000, scoped, tag = 'internal scratch']
  %s0 = inlined_call_operand.vmem [shape: f32[8,16], index: 0, kind: input, shape index: {}]
  %s1 = inlined_call_operand.vmem [shape: f32[16,128], index: 1, kind: input, shape index: {}]
  %s2 = inlined_call_operand.vmem [shape: f32[8,128], index: 2, kind: input, shape index: {}, may-alias: {2,7}]
  %s3 = inlined_call_operand.vmem [shape: f32[8,128], index: 3, kind: input, shape index: {}, may-alias: {3,8}]
  %s4 = inlined_call_operand.vmem [shape: f32[8,128], index: 4, kind: input, shape index: {}, may-alias: {4,9}]
  %s5 = inlined_call_operand.vmem [shape: f32[8,128], index: 5, kind: input, shape index: {}, may-alias: {5,10}]
  %s6 = inlined_call_operand.vmem [shape: f32[8,128], index: 6, kind: input, shape index: {}]
  %s7 = inlined_call_operand.vmem [shape: f32[8,128], index: 7, kind: output, shape index: {0}, may-alias: {2,7}]
  %s8 = inlined_call_operand.vmem [shape: f32[8,128], index: 8, kind: output, shape index: {1}, may-alias: {3,8}]
  %s9 = inlined_call_operand.vmem [shape: f32[8,128], index: 9, kind: output, shape index: {2}, may-alias: {4,9}]
  %s10 = inlined_call_operand.vmem [shape: f32[8,128], index: 10, kind: output, shape index: {3}, may-alias: {5,10}]
  %11 = xla_tuple %s7, %s8, %s9, %s10
  %s12 = sld [smem:[#allocation0]]
  $region62: #{adbrf_ii_cell_forward.1} parent=0
    _
  %s14 = ssub.s32 1, %s12
  %s15 = scalar_select 0, %s14, %s12
  // Predicated region
  $region2: #{adbrf_ii_cell_forward.1} parent=0 // pred_check
    _
  $region3: #{adbrf_ii_cell_forward.1} parent=0 // pred_check_branch
    %17 = sbr.rel (0) target = $region5
  $region4: #{adbrf_ii_cell_forward.1} parent=0 // pred_region
    _
  $region5: #{adbrf_ii_cell_forward.1} parent=0 // pred_fallthru
    _
  // Predicated region
  $region6: #{adbrf_ii_cell_forward.1} parent=0 // pred_check
    _
  $region7: #{adbrf_ii_cell_forward.1} parent=0 // pred_check_branch
    %19 = sbr.rel (0) target = $region9
  $region8: #{adbrf_ii_cell_forward.1} parent=0 // pred_region
    _
  $region9: #{adbrf_ii_cell_forward.1} parent=0 // pred_fallthru
    _
  // Predicated region
  $region10: #{adbrf_ii_cell_forward.1} parent=0 // pred_check
    _
  $region11: #{adbrf_ii_cell_forward.1} parent=0 // pred_check_branch
    %21 = sbr.rel (0) target = $region13
  $region12: #{adbrf_ii_cell_forward.1} parent=0 // pred_region
    _
  $region13: #{adbrf_ii_cell_forward.1} parent=0 // pred_fallthru
    _
  // Predicated region
  $region14: #{adbrf_ii_cell_forward.1} parent=0 // pred_check
    _
  $region15: #{adbrf_ii_cell_forward.1} parent=0 // pred_check_branch
    %23 = sbr.rel (0) target = $region17
  $region16: #{adbrf_ii_cell_forward.1} parent=0 // pred_region
    _
  $region17: #{adbrf_ii_cell_forward.1} parent=0 // pred_fallthru
    _
  // Predicated region
  $region18: #{adbrf_ii_cell_forward.1} parent=0 // pred_check
    _
  $region19: #{adbrf_ii_cell_forward.1} parent=0 // pred_check_branch
    %25 = sbr.rel (0) target = $region21
  $region20: #{adbrf_ii_cell_forward.1} parent=0 // pred_region
    _
  $region21: #{adbrf_ii_cell_forward.1} parent=0 // pred_fallthru
    _
  // Predicated region
  $region22: #{adbrf_ii_cell_forward.1} parent=0 // pred_check
    _
  $region23: #{adbrf_ii_cell_forward.1} parent=0 // pred_check_branch
    %27 = sbr.rel (0) target = $region25
  $region24: #{adbrf_ii_cell_forward.1} parent=0 // pred_region
    _
  $region25: #{adbrf_ii_cell_forward.1} parent=0 // pred_fallthru
    _
  // Predicated region
  $region26: #{adbrf_ii_cell_forward.1} parent=0 // pred_check
    _
  $region27: #{adbrf_ii_cell_forward.1} parent=0 // pred_check_branch
    %29 = sbr.rel (0) target = $region29
  $region28: #{adbrf_ii_cell_forward.1} parent=0 // pred_region
    _
  $region29: #{adbrf_ii_cell_forward.1} parent=0 // pred_fallthru
    _
  %v30 = vld [vmem:[%s0] sm:$0xff]
  %v31 = vld [vmem:[%s1] sm:$0xff]
  %v32 = vld [vmem:[%s1 + $0x8] sm:$0xff]
  %vm33 = vcmask 130048
  %v35 = vsel %vm33, %v30, 0
  %37 = vmatprep.subr.mxu0 0.0
  %38 = vmatpush1.msra.mxu0 %v31
  %39 = vmatprep.subr.mxu0 0.0
  %40 = vmatpush1.msra.mxu0 %v32
  %41 = vmatprep.subr.mxu0 0.0
  %42 = vmatpush1.msra.mxu0 0.0
  %43 = vmatprep.subr.mxu0 0.0
  %44 = vmatpush1.msra.mxu0 0.0
  %45 = vmatprep.subr.mxu0 0.0
  %46 = vmatpush1.msra.mxu0 0.0
  %47 = vmatprep.subr.mxu0 0.0
  %48 = vmatpush1.msra.mxu0 0.0
  %49 = vmatprep.subr.mxu0 0.0
  %50 = vmatpush1.msra.mxu0 0.0
  %51 = vmatprep.subr.mxu0 0.0
  %52 = vmatpush1.msra.mxu0 0.0
  %53 = vmatprep.subr.mxu0 0.0
  %54 = vmatpush1.msra.mxu0 0.0
  %55 = vmatprep.subr.mxu0 0.0
  %56 = vmatpush1.msra.mxu0 0.0
  %57 = vmatprep.subr.mxu0 0.0
  %58 = vmatpush1.msra.mxu0 0.0
  %59 = vmatprep.subr.mxu0 0.0
  %60 = vmatpush1.msra.mxu0 0.0
  %61 = vmatprep.subr.mxu0 0.0
  %62 = vmatpush1.msra.mxu0 0.0
  %63 = vmatprep.subr.mxu0 0.0
  %64 = vmatpush1.msra.mxu0 0.0
  %65 = vmatprep.subr.mxu0 0.0
  %66 = vmatpush1.msra.mxu0 0.0
  %67 = vmatprep.subr.mxu0 0.0
  %68 = vmatpush1.msra.mxu0 0.0
  %69 = vmatprep.subr.mxu0 0.0
  %70 = vmatpush1.msra.mxu0 0.0
  %71 = vmatprep.subr.mxu0 0.0
  %72 = vmatpush1.msra.mxu0 0.0
  %73 = vmatprep.subr.mxu0 0.0
  %74 = vmatpush1.msra.mxu0 0.0
  %75 = vmatprep.subr.mxu0 0.0
  %76 = vmatpush1.msra.mxu0 0.0
  %77 = vmatprep.subr.mxu0 0.0
  %78 = vmatpush1.msra.mxu0 0.0
  %79 = vmatprep.subr.mxu0 0.0
  %80 = vmatpush1.msra.mxu0 0.0
  %81 = vmatprep.subr.mxu0 0.0
  %82 = vmatpush1.msra.mxu0 0.0
  %83 = vmatprep.subr.mxu0 0.0
  %84 = vmatpush1.msra.mxu0 0.0
  %85 = vmatprep.subr.mxu0 0.0
  %86 = vmatpush1.msra.mxu0 0.0
  %87 = vmatprep.subr.mxu0 0.0
  %88 = vmatpush1.msra.mxu0 0.0
  %89 = vmatprep.subr.mxu0 0.0
  %90 = vmatpush1.msra.mxu0 0.0
  %91 = vmatprep.subr.mxu0 0.0
  %92 = vmatpush1.msra.mxu0 0.0
  %93 = vmatprep.subr.mxu0 0.0
  %94 = vmatpush1.msra.mxu0 0.0
  %95 = vmatprep.subr.mxu0 0.0
  %96 = vmatpush1.msra.mxu0 0.0
  %97 = vmatprep.subr.mxu0 0.0
  %98 = vmatpush1.msra.mxu0 0.0
  %99 = vmatprep.subr.mxu0 0.0
  %100 = vmatpush1.msra.mxu0 0.0
  %101 = vmatprep.mubr.f32.mxu0 0.0
  %102 = vmatmul.mubr.f32.gmra.mrb[0].mxu0 %v35
  %v103 = vpop.f32.mrb[0].mxu0
  %v104 = vadd.f32 0.0, %v103
  %v105 = vpop.f32.mrb[0].mxu0
  %106 = vdwg.mxu0
  %v107 = vld [vmem:[%s2] sm:$0xff]
  %v108 = vld [vmem:[%s3] sm:$0xff]
  %v109 = vld [vmem:[%s4] sm:$0xff]
  %v110 = vld [vmem:[%s5] sm:$0xff]
  %v111 = vld [vmem:[%s6] sm:$0xff]
  %v112 = vand.u32 2147483647, %v111
  %v113 = vsub.f32 0.0, %v112
  %v114 = vlaneseq
  %v115 = vshrl.u32 %v114, 7
  %v116 = vsub.s32 0, %v115
  %v117 = vrot.slane %v113, %v116
  %v118 = vsub.f32 %v117, %v110
  %v119 = vlaneseq
  %v120 = vshrl.u32 %v119, 7
  %v121 = vsub.s32 4, %v120
  %v122 = vrot.slane %v111, %v121
  %v123 = vmul.f32 %v118, %v122
  %v124 = vmul.f32 %v123, 1.442695
  %v125 = vpow.pop %v124
  %v126 = vlaneseq
  %v127 = vshrl.u32 %v126, 7
  %v128 = vsub.s32 1, %v127
  %v129 = vrot.slane %v111, %v128
  %v130 = vmul.f32 %v108, %v129
  %v131 = vlaneseq
  %v132 = vshrl.u32 %v131, 7
  %v133 = vsub.s32 2, %v132
  %v134 = vrot.slane %v111, %v133
  %v135 = vmul.f32 %v109, %v134
  %v136 = vsub.f32 %v130, %v135
  %v137 = vmul.f32 %v108, %v134
  %v138 = vmul.f32 %v109, %v129
  %v139 = vadd.f32 %v137, %v138
  %v140 = vmul.f32 %v125, %v136
  %v141 = vmul.f32 %v104, %v122
  %v142 = vadd.f32 %v140, %v141
  %v143 = vmul.f32 %v125, %v139
  %v144 = vlaneseq
  %v145 = vshrl.u32 %v144, 7
  %v146 = vsub.s32 3, %v145
  %v147 = vrot.slane %v111, %v146
  %v148 = vmul.f32 %v147, %v110
  %v149 = vadd.f32 %v148, %v107
  %v150 = vsub.f32 %v108, 0.1
  %v151 = vsub.f32 %v150, %v149
  %vm152 = vcmp.gt.f32.partialorder %v151, 0.0
  %v153 = vsel %vm152, 1, 0
  %v154 = vcvt.s32.f32 %v153
  %155 = vst [vmem:[%s7] sm:$0xff] %v154
  %156 = vst [vmem:[%s8] sm:$0xff] %v142
  %157 = vst [vmem:[%s9] sm:$0xff] %v143
  %158 = vst [vmem:[%s10] sm:$0xff] %v149
  // Predicated region
  $region30: #{adbrf_ii_cell_forward.1} parent=0 // pred_check
    _
  $region31: #{adbrf_ii_cell_forward.1} parent=0 // pred_check_branch
    %160 = sbr.rel (0) target = $region33
  $region32: #{adbrf_ii_cell_forward.1} parent=0 // pred_region
    _
  $region33: #{adbrf_ii_cell_forward.1} parent=0 // pred_fallthru
    _
  // Predicated region
  $region34: #{adbrf_ii_cell_forward.1} parent=0 // pred_check
    _
  $region35: #{adbrf_ii_cell_forward.1} parent=0 // pred_check_branch
    %162 = sbr.rel (0) target = $region37
  $region36: #{adbrf_ii_cell_forward.1} parent=0 // pred_region
    _
  $region37: #{adbrf_ii_cell_forward.1} parent=0 // pred_fallthru
    _
  // Predicated region
  $region38: #{adbrf_ii_cell_forward.1} parent=0 // pred_check
    _
  $region39: #{adbrf_ii_cell_forward.1} parent=0 // pred_check_branch
    %164 = sbr.rel (0) target = $region41
  $region40: #{adbrf_ii_cell_forward.1} parent=0 // pred_region
    _
  $region41: #{adbrf_ii_cell_forward.1} parent=0 // pred_fallthru
    _
  // Predicated region
  $region42: #{adbrf_ii_cell_forward.1} parent=0 // pred_check
    _
  $region43: #{adbrf_ii_cell_forward.1} parent=0 // pred_check_branch
    %166 = sbr.rel (0) target = $region45
  $region44: #{adbrf_ii_cell_forward.1} parent=0 // pred_region
    _
  $region45: #{adbrf_ii_cell_forward.1} parent=0 // pred_fallthru
    _
  // Predicated region
  $region46: #{adbrf_ii_cell_forward.1} parent=0 // pred_check
    _
  $region47: #{adbrf_ii_cell_forward.1} parent=0 // pred_check_branch
    %168 = sbr.rel (0) target = $region49
  $region48: #{adbrf_ii_cell_forward.1} parent=0 // pred_region
    _
  $region49: #{adbrf_ii_cell_forward.1} parent=0 // pred_fallthru
    _
  // Predicated region
  $region50: #{adbrf_ii_cell_forward.1} parent=0 // pred_check
    _
  $region51: #{adbrf_ii_cell_forward.1} parent=0 // pred_check_branch
    %170 = sbr.rel (0) target = $region53
  $region52: #{adbrf_ii_cell_forward.1} parent=0 // pred_region
    _
  $region53: #{adbrf_ii_cell_forward.1} parent=0 // pred_fallthru
    _
  // Predicated region
  $region54: #{adbrf_ii_cell_forward.1} parent=0 // pred_check
    _
  $region55: #{adbrf_ii_cell_forward.1} parent=0 // pred_check_branch
    %172 = sbr.rel (0) target = $region57
  $region56: #{adbrf_ii_cell_forward.1} parent=0 // pred_region
    _
  $region57: #{adbrf_ii_cell_forward.1} parent=0 // pred_fallthru
    _
  // Predicated region
  $region58: #{adbrf_ii_cell_forward.1} parent=0 // pred_check
    _
  $region59: #{adbrf_ii_cell_forward.1} parent=0 // pred_check_branch
    %174 = sbr.rel (0) target = $region61
  $region60: #{adbrf_ii_cell_forward.1} parent=0 // pred_region
    _
  $region61: #{adbrf_ii_cell_forward.1} parent=0 // pred_fallthru
    _

</llo_original>
